<compile_context>
chip_gen: v6e
topology: v6e:2x2x1
jax: 0.10.0
libtpu: 0.0.40
codegen_flags: <defaults>
</compile_context>

<pallas_src>
import jax
import jax.numpy as jnp
from jax.experimental import pallas as pl
from jax.experimental.pallas import tpu as pltpu


# --------------------------------------------------------------------------
# Kernel: SAM branch + spatial gating + channel gating + elementwise max.
# Block view: x (C, T), cam (C, 1), output (C, T); weights fully resident.
# --------------------------------------------------------------------------
def _scam_kernel(x_ref, cam_ref, wx_ref, bx_ref, wy_ref, by_ref, w5_ref, b5_ref,
                 o_ref):
    f32 = jnp.float32
    x = x_ref[...]                       # (C, T) in I/O dtype (bf16 by default)
    x_mx = x.astype(wx_ref.dtype)        # MXU operand dtype
    x_f32 = x.astype(f32)                # gating math stays f32 (v5e: no bf16 VALU)

    # Fused projection from x: rows 0:32 -> x1 (relu),
    #                          rows 32:64 -> x2 contribution (relu),
    #                          row 64     -> s contribution (sigmoid).
    px = jnp.dot(wx_ref[...], x_mx, preferred_element_type=f32) + bx_ref[...]  # (65, T)
    x1 = jax.nn.relu(px[0:32, :])                                               # (32, T)

    # Fused projection from x1: rows 0:32 -> x2 contribution (relu),
    #                           row 32    -> s contribution (sigmoid).
    py = (jnp.dot(wy_ref[...], x1.astype(wy_ref.dtype), preferred_element_type=f32)
          + by_ref[...])                                                        # (33, T)
    x2 = jax.nn.relu(px[32:64, :]) + jax.nn.relu(py[0:32, :])                    # (32, T)

    s = (jax.nn.sigmoid(px[64:65, :]) +
         jax.nn.sigmoid(py[32:33, :]) +
         jax.nn.sigmoid(jnp.dot(w5_ref[...], x2.astype(w5_ref.dtype),
                                preferred_element_type=f32) + b5_ref[...]))      # (1, T)

    sam_out = x_f32 * (s * (1.0 / 3.0))    # spatial gate, broadcast over C rows
    cam_out = x_f32 * cam_ref[...]         # channel gate (C,1), broadcast over lanes
    o_ref[...] = jnp.maximum(sam_out, cam_out).astype(o_ref.dtype)


# --------------------------------------------------------------------------
# Generation-aware tiling helpers.
# --------------------------------------------------------------------------
def _vmem_capacity_bytes():
    """Physical per-core VMEM, with a conservative (v7x) fallback."""
    try:
        cap = getattr(pltpu.get_tpu_info(), "vmem_capacity_bytes", None)
        if cap:
            return int(cap)
    except Exception:
        pass
    return 64 * 1024 * 1024  # v7x per-TensorCore VMEM (smallest current generation)


def _pick_tile_hw(hw, c, io_bytes, vmem_budget_bytes):
    """Largest lane tile (multiple of 128 dividing HW) whose pipelined footprint fits.

    Per lane-column footprint (bytes):
      x in + out : 2 arrays x 2 pipeline buffers x C rows x io_bytes
      f32 scratch: px(65) + py(33) + x1(32) + x2(32) + s(1) ~= 163 rows
                   + C rows for the f32 copy of x used by the gating math
    Capped at 1024 lanes (measured tile curve saturates at ~1024; at 2048 the
    f32 intermediates compete for the single store slot on v5e).
    """
    if hw % 128 != 0:
        return hw                        # block must equal the full dim
    per_col = 4 * c * io_bytes + (163 + c) * 4
    cap = max(128, min(vmem_budget_bytes // per_col, 1024, hw))
    cap = (cap // 128) * 128
    t = cap
    while t >= 128:
        if hw % t == 0:
            return t
        t -= 128
    return hw


# --------------------------------------------------------------------------
# Wrapper.
# --------------------------------------------------------------------------
def scam_p_forward(x, sam_ws, sam_bs, cam_ws, cam_bs, *,
                   io_dtype=jnp.bfloat16, mxu_dtype=jnp.bfloat16):
    """x: (B, C, H, W) NCHW. Returns (B, C, H, W) in io_dtype.

    io_dtype:  dtype of the HBM<->VMEM activation path (bf16 halves the HBM
               traffic that dominates this kernel).
    mxu_dtype: dtype of the matmul operands (bf16-native MXU on v6e/v7x).
               Accumulation is always f32; elementwise gating is always f32.
    """
    B, C, H, W = x.shape
    HW = H * W
    xb = x.reshape(B, C, HW).astype(io_dtype)            # NCHW kept; HW on lanes

    # ---- CAM branch hoisted to the wrapper (tiny: ~32*C FLOPs / image) ----
    # GAP reads the (possibly bf16) activation copy; accumulation is f32.
    gap = jnp.mean(xb, axis=2, dtype=jnp.float32)        # (B, C)
    v0, v1, v2, v3, v4, v5 = cam_ws                      # (in, out)
    c0, c1, c2, c3, c4, c5 = cam_bs                      # (1, out)
    y0 = gap[..., None]                                  # (B, C, 1)
    y1 = jax.nn.relu(y0 @ v0 + c0)                       # (B, C, 32)
    y2 = jax.nn.relu(y0 @ v1 + c1) + jax.nn.relu(y1 @ v2 + c2)
    t = (jax.nn.sigmoid(y0 @ v3 + c3) + jax.nn.sigmoid(y1 @ v4 + c4) +
         jax.nn.sigmoid(y2 @ v5 + c5))                   # (B, C, 1)
    cam_att = (t * (1.0 / 3.0)).astype(jnp.float32)      # (B, C, 1)

    # ---- SAM weight fusion (done once in the wrapper, not per grid step) ----
    # Tiny-K guard: for very small C the first matmul gains nothing from bf16
    # and f32 operands are the safest lowering; wy/w5 (K=32) stay in mxu_dtype.
    wx_dtype = mxu_dtype if C >= 16 else jnp.float32
    w0, w1, w2, w3, w4, w5 = sam_ws                      # (in, out)
    b0, b1, b2, b3, b4, b5 = sam_bs                      # (1, out)
    wx = jnp.concatenate([w0.T, w1.T, w3.T], axis=0).astype(wx_dtype)     # (65, C)
    bx = jnp.concatenate([b0.T, b1.T, b3.T], axis=0).astype(jnp.float32)  # (65, 1)
    wy = jnp.concatenate([w2.T, w4.T], axis=0).astype(mxu_dtype)          # (33, 32)
    by = jnp.concatenate([b2.T, b4.T], axis=0).astype(jnp.float32)        # (33, 1)
    w5t = w5.T.astype(mxu_dtype)                                          # (1, 32)
    b5t = b5.T.astype(jnp.float32)                                        # (1, 1)

    # ---- Generation-aware VMEM budget and tiling ----
    vmem_cap = _vmem_capacity_bytes()
    vmem_limit = min(vmem_cap * 3 // 4, 96 * 1024 * 1024)   # ~48 MiB v7x, 96 MiB v5e/v6e
    io_bytes = jnp.dtype(io_dtype).itemsize
    tile_hw = _pick_tile_hw(HW, C, io_bytes, vmem_limit * 3 // 4)
    # v7x has 2 TensorCores: guarantee >= 2 grid steps so both get work.
    while B * (HW // tile_hw) < 2 and tile_hw % 256 == 0:
        tile_hw //= 2
    grid = (B, HW // tile_hw)
    # TODO(synk): for C < 8, pack 8//C images per grid step (block-diagonal wx)
    # to fill vreg sublanes and cut grid-step count.
    # TODO(synk): sweep tile_hw in {512, 1024, 2048} and try
    # pipeline_mode=pl.Buffered(3) on the x BlockSpec if DMA is exposed.

    def resident(p):                       # constant index map -> stays in VMEM
        return pl.BlockSpec(p.shape, lambda b, t: (0, 0))

    out = pl.pallas_call(
        _scam_kernel,
        out_shape=jax.ShapeDtypeStruct((B, C, HW), io_dtype),
        grid=grid,
        in_specs=[
            pl.BlockSpec((None, C, tile_hw), lambda b, t: (b, 0, t)),   # x
            pl.BlockSpec((None, C, 1), lambda b, t: (b, 0, 0)),         # cam_att
            resident(wx), resident(bx),
            resident(wy), resident(by),
            resident(w5t), resident(b5t),
        ],
        out_specs=pl.BlockSpec((None, C, tile_hw), lambda b, t: (b, 0, t)),
        compiler_params=pltpu.CompilerParams(
            dimension_semantics=("parallel", "parallel"),
            vmem_limit_bytes=int(vmem_limit),
        ),
    )(xb, cam_att, wx, bx, wy, by, w5t, b5t)

    return out.reshape(B, C, H, W)


# --------------------------------------------------------------------------
# Pure-JAX reference mirroring the PyTorch Cell/SCAM_P dataflow (f32).
# --------------------------------------------------------------------------
def scam_p_reference(x, sam_ws, sam_bs, cam_ws, cam_bs):
    B, C, H, W = x.shape
    xl = jnp.transpose(x, (0, 2, 3, 1)).reshape(B, H * W, C)
    w0, w1, w2, w3, w4, w5 = sam_ws
    b0, b1, b2, b3, b4, b5 = sam_bs
    x1 = jax.nn.relu(xl @ w0 + b0)
    x2 = jax.nn.relu(xl @ w1 + b1) + jax.nn.relu(x1 @ w2 + b2)
    s = (jax.nn.sigmoid(xl @ w3 + b3) + jax.nn.sigmoid(x1 @ w4 + b4) +
         jax.nn.sigmoid(x2 @ w5 + b5)) / 3.0
    sam = xl * s

    v0, v1, v2, v3, v4, v5 = cam_ws
    c0, c1, c2, c3, c4, c5 = cam_bs
    gap = jnp.mean(xl, axis=1)                                        # (B, C)
    y0 = gap[..., None]                                               # (B, C, 1)
    y1 = jax.nn.relu(y0 @ v0 + c0)
    y2 = jax.nn.relu(y0 @ v1 + c1) + jax.nn.relu(y1 @ v2 + c2)
    t = (jax.nn.sigmoid(y0 @ v3 + c3) + jax.nn.sigmoid(y1 @ v4 + c4) +
         jax.nn.sigmoid(y2 @ v5 + c5)) / 3.0                          # (B, C, 1)
    cam = xl * jnp.transpose(t, (0, 2, 1))                            # (B, HW, C)

    out = jnp.maximum(sam, cam)
    return jnp.transpose(out.reshape(B, H, W, C), (0, 3, 1, 2))


def init_params(key, C):
    # MixedOp channel plan for operation_number=3: channel_list = [C, 32, 32, 1]
    #   op0: C->32, op1: C->32, op2: 32->32, op3: C->1, op4: 32->1, op5: 32->1
    sam_dims = [(C, 32), (C, 32), (32, 32), (C, 1), (32, 1), (32, 1)]
    cam_dims = [(1, 32), (1, 32), (32, 32), (1, 1), (32, 1), (32, 1)]
    n = len(sam_dims) + len(cam_dims)
    keys = jax.random.split(key, 2 * n)
    sam_ws, sam_bs, cam_ws, cam_bs = [], [], [], []
    ki = 0
    for (i, o) in sam_dims:
        sam_ws.append(0.2 * jax.random.normal(keys[ki], (i, o), jnp.float32)); ki += 1
        sam_bs.append(0.1 * jax.random.normal(keys[ki], (1, o), jnp.float32)); ki += 1
    for (i, o) in cam_dims:
        cam_ws.append(0.2 * jax.random.normal(keys[ki], (i, o), jnp.float32)); ki += 1
        cam_bs.append(0.1 * jax.random.normal(keys[ki], (1, o), jnp.float32)); ki += 1
    return sam_ws, sam_bs, cam_ws, cam_bs


if __name__ == "__main__":
    key = jax.random.PRNGKey(0)
    kx, kp = jax.random.split(key)
    B, C, H, W = 2, 4, 16, 16
    x = jax.random.normal(kx, (B, C, H, W), jnp.float32)
    sam_ws, sam_bs, cam_ws, cam_bs = init_params(kp, C)

    ref = scam_p_reference(x, sam_ws, sam_bs, cam_ws, cam_bs)

    # Strict f32 path: validates fused/tiled kernel math against the module.
    out_f32 = scam_p_forward(x, sam_ws, sam_bs, cam_ws, cam_bs,
                             io_dtype=jnp.float32, mxu_dtype=jnp.float32)
    out_f32 = jax.block_until_ready(out_f32)
    assert out_f32.shape == (B, C, H, W), out_f32.shape
    assert jnp.allclose(out_f32, ref, atol=1e-5, rtol=1e-5), \
        float(jnp.max(jnp.abs(out_f32 - ref)))

    # Default fast path: bf16 HBM I/O + bf16 MXU operands, f32 accumulation/gating.
    out_bf16 = scam_p_forward(x, sam_ws, sam_bs, cam_ws, cam_bs)
    out_bf16 = jax.block_until_ready(out_bf16)
    assert out_bf16.shape == (B, C, H, W), out_bf16.shape
    assert out_bf16.dtype == jnp.bfloat16, out_bf16.dtype
    assert jnp.allclose(out_bf16.astype(jnp.float32), ref, atol=5e-2, rtol=5e-2), \
        float(jnp.max(jnp.abs(out_bf16.astype(jnp.float32) - ref)))

    print("KERNEL_OK")
</pallas_src>

<mosaic_0001>
module attributes {stable_mosaic.version = 11 : i64} {
  func.func @_scam_kernel(%arg0: i32, %arg1: i32, %arg2: memref<1x4x256xf32, #tpu.memory_space<vmem>>, %arg3: memref<1x4x1xf32, #tpu.memory_space<vmem>>, %arg4: memref<65x4xf32, #tpu.memory_space<vmem>>, %arg5: memref<65x1xf32, #tpu.memory_space<vmem>>, %arg6: memref<33x32xf32, #tpu.memory_space<vmem>>, %arg7: memref<33x1xf32, #tpu.memory_space<vmem>>, %arg8: memref<1x32xf32, #tpu.memory_space<vmem>>, %arg9: memref<1x1xf32, #tpu.memory_space<vmem>>, %arg10: memref<1x4x256xf32, #tpu.memory_space<vmem>>) attributes {dimension_semantics = [#tpu.dimension_semantics<parallel>, #tpu.dimension_semantics<parallel>], iteration_bounds = array<i64: 2, 1>, scalar_prefetch = 0 : i64, scratch_operands = 0 : i64, tpu.core_type = #tpu.core_type<tc>, window_params = [{transform_indices = @transform_0, window_bounds = array<i64: 1, 4, 256>}, {transform_indices = @transform_1, window_bounds = array<i64: 1, 4, 1>}, {pipeline_mode = #tpu.pipeline_mode<synchronous>, transform_indices = @transform_2, window_bounds = array<i64: 65, 4>}, {pipeline_mode = #tpu.pipeline_mode<synchronous>, transform_indices = @transform_3, window_bounds = array<i64: 65, 1>}, {pipeline_mode = #tpu.pipeline_mode<synchronous>, transform_indices = @transform_4, window_bounds = array<i64: 33, 32>}, {pipeline_mode = #tpu.pipeline_mode<synchronous>, transform_indices = @transform_5, window_bounds = array<i64: 33, 1>}, {pipeline_mode = #tpu.pipeline_mode<synchronous>, transform_indices = @transform_6, window_bounds = array<i64: 1, 32>}, {pipeline_mode = #tpu.pipeline_mode<synchronous>, transform_indices = @transform_7, window_bounds = array<i64: 1, 1>}, {transform_indices = @transform_8, window_bounds = array<i64: 1, 4, 256>}]} {
    %c0 = arith.constant 0 : index
    %c0_0 = arith.constant 0 : index
    %c0_1 = arith.constant 0 : index
    %0 = vector.load %arg2[%c0, %c0_0, %c0_1] : memref<1x4x256xf32, #tpu.memory_space<vmem>>, vector<1x4x256xf32>
    %1 = vector.shape_cast %0 : vector<1x4x256xf32> to vector<4x256xf32>
    %c0_2 = arith.constant 0 : index
    %c0_3 = arith.constant 0 : index
    %2 = vector.load %arg4[%c0_2, %c0_3] : memref<65x4xf32, #tpu.memory_space<vmem>>, vector<65x4xf32>
    %cst = arith.constant dense<0.000000e+00> : vector<65x256xf32>
    %3 = tpu.matmul %2, %1, %cst {dimension_numbers = #tpu.dot_dimension_numbers<[1], [0], [0], [1], [0, 0, 1, 1], [], []>} : vector<65x4xf32>, vector<4x256xf32>, vector<65x256xf32> -> vector<65x256xf32>
    %c0_4 = arith.constant 0 : index
    %c0_5 = arith.constant 0 : index
    %4 = vector.load %arg5[%c0_4, %c0_5] : memref<65x1xf32, #tpu.memory_space<vmem>>, vector<65x1xf32>
    %5 = vector.broadcast %4 : vector<65x1xf32> to vector<65x256xf32>
    %6 = arith.addf %3, %5 : vector<65x256xf32>
    %7 = vector.extract_strided_slice %6 {offsets = [0, 0], sizes = [32, 256], strides = [1, 1]} : vector<65x256xf32> to vector<32x256xf32>
    %cst_6 = arith.constant 0.000000e+00 : f32
    %8 = vector.broadcast %cst_6 : f32 to vector<32x256xf32>
    %9 = arith.maximumf %7, %8 : vector<32x256xf32>
    %c0_7 = arith.constant 0 : index
    %c0_8 = arith.constant 0 : index
    %10 = vector.load %arg6[%c0_7, %c0_8] : memref<33x32xf32, #tpu.memory_space<vmem>>, vector<33x32xf32>
    %cst_9 = arith.constant dense<0.000000e+00> : vector<33x256xf32>
    %11 = tpu.matmul %10, %9, %cst_9 {dimension_numbers = #tpu.dot_dimension_numbers<[1], [0], [0], [1], [0, 0, 1, 1], [], []>} : vector<33x32xf32>, vector<32x256xf32>, vector<33x256xf32> -> vector<33x256xf32>
    %c0_10 = arith.constant 0 : index
    %c0_11 = arith.constant 0 : index
    %12 = vector.load %arg7[%c0_10, %c0_11] : memref<33x1xf32, #tpu.memory_space<vmem>>, vector<33x1xf32>
    %13 = vector.broadcast %12 : vector<33x1xf32> to vector<33x256xf32>
    %14 = arith.addf %11, %13 : vector<33x256xf32>
    %15 = vector.extract_strided_slice %6 {offsets = [32, 0], sizes = [32, 256], strides = [1, 1]} : vector<65x256xf32> to vector<32x256xf32>
    %cst_12 = arith.constant 0.000000e+00 : f32
    %16 = vector.broadcast %cst_12 : f32 to vector<32x256xf32>
    %17 = arith.maximumf %15, %16 : vector<32x256xf32>
    %18 = vector.extract_strided_slice %14 {offsets = [0, 0], sizes = [32, 256], strides = [1, 1]} : vector<33x256xf32> to vector<32x256xf32>
    %cst_13 = arith.constant 0.000000e+00 : f32
    %19 = vector.broadcast %cst_13 : f32 to vector<32x256xf32>
    %20 = arith.maximumf %18, %19 : vector<32x256xf32>
    %21 = arith.addf %17, %20 : vector<32x256xf32>
    %22 = vector.extract_strided_slice %6 {offsets = [64, 0], sizes = [1, 256], strides = [1, 1]} : vector<65x256xf32> to vector<1x256xf32>
    %23 = arith.negf %22 : vector<1x256xf32>
    %24 = math.exp %23 : vector<1x256xf32>
    %cst_14 = arith.constant 1.000000e+00 : f32
    %25 = vector.broadcast %cst_14 : f32 to vector<1x256xf32>
    %26 = arith.addf %25, %24 : vector<1x256xf32>
    %27 = arith.divf %25, %26 : vector<1x256xf32>
    %28 = vector.extract_strided_slice %14 {offsets = [32, 0], sizes = [1, 256], strides = [1, 1]} : vector<33x256xf32> to vector<1x256xf32>
    %29 = arith.negf %28 : vector<1x256xf32>
    %30 = math.exp %29 : vector<1x256xf32>
    %cst_15 = arith.constant 1.000000e+00 : f32
    %31 = vector.broadcast %cst_15 : f32 to vector<1x256xf32>
    %32 = arith.addf %31, %30 : vector<1x256xf32>
    %33 = arith.divf %31, %32 : vector<1x256xf32>
    %34 = arith.addf %27, %33 : vector<1x256xf32>
    %c0_16 = arith.constant 0 : index
    %c0_17 = arith.constant 0 : index
    %35 = vector.load %arg8[%c0_16, %c0_17] : memref<1x32xf32, #tpu.memory_space<vmem>>, vector<1x32xf32>
    %cst_18 = arith.constant dense<0.000000e+00> : vector<1x256xf32>
    %36 = tpu.matmul %35, %21, %cst_18 {dimension_numbers = #tpu.dot_dimension_numbers<[1], [0], [0], [1], [0, 0, 1, 1], [], []>} : vector<1x32xf32>, vector<32x256xf32>, vector<1x256xf32> -> vector<1x256xf32>
    %c0_19 = arith.constant 0 : index
    %c0_20 = arith.constant 0 : index
    %37 = vector.load %arg9[%c0_19, %c0_20] : memref<1x1xf32, #tpu.memory_space<vmem>>, vector<1x1xf32>
    %38 = vector.broadcast %37 : vector<1x1xf32> to vector<1x256xf32>
    %39 = arith.addf %36, %38 : vector<1x256xf32>
    %40 = arith.negf %39 : vector<1x256xf32>
    %41 = math.exp %40 : vector<1x256xf32>
    %cst_21 = arith.constant 1.000000e+00 : f32
    %42 = vector.broadcast %cst_21 : f32 to vector<1x256xf32>
    %43 = arith.addf %42, %41 : vector<1x256xf32>
    %44 = arith.divf %42, %43 : vector<1x256xf32>
    %45 = arith.addf %34, %44 : vector<1x256xf32>
    %cst_22 = arith.constant 0.333333343 : f32
    %46 = vector.broadcast %cst_22 : f32 to vector<1x256xf32>
    %47 = arith.mulf %45, %46 : vector<1x256xf32>
    %48 = vector.broadcast %47 : vector<1x256xf32> to vector<4x256xf32>
    %49 = arith.mulf %1, %48 : vector<4x256xf32>
    %c0_23 = arith.constant 0 : index
    %c0_24 = arith.constant 0 : index
    %c0_25 = arith.constant 0 : index
    %50 = vector.load %arg3[%c0_23, %c0_24, %c0_25] : memref<1x4x1xf32, #tpu.memory_space<vmem>>, vector<1x4x1xf32>
    %51 = vector.shape_cast %50 : vector<1x4x1xf32> to vector<4x1xf32>
    %52 = vector.broadcast %51 : vector<4x1xf32> to vector<4x256xf32>
    %53 = arith.mulf %1, %52 : vector<4x256xf32>
    %54 = arith.maximumf %49, %53 : vector<4x256xf32>
    %c0_26 = arith.constant 0 : index
    %c0_27 = arith.constant 0 : index
    %c0_28 = arith.constant 0 : index
    %55 = vector.load %arg10[%c0_26, %c0_27, %c0_28] : memref<1x4x256xf32, #tpu.memory_space<vmem>>, vector<1x4x256xf32>
    %56 = vector.shape_cast %55 : vector<1x4x256xf32> to vector<4x256xf32>
    %57 = vector.shape_cast %54 : vector<4x256xf32> to vector<1x4x256xf32>
    tpu.vector_store %arg10[%c0_26, %c0_27, %c0_28], %57 {strides = array<i32>} : memref<1x4x256xf32, #tpu.memory_space<vmem>>, vector<1x4x256xf32>,
    return
  }
  func.func @transform_0(%arg0: i32, %arg1: i32) -> (i32, i32, i32) {
    %c0_i32 = arith.constant 0 : i32
    %c0_i32_0 = arith.constant 0 : i32
    return %arg0, %c0_i32, %arg1 : i32, i32, i32
  }
  func.func @transform_1(%arg0: i32, %arg1: i32) -> (i32, i32, i32) {
    %c0_i32 = arith.constant 0 : i32
    %c0_i32_0 = arith.constant 0 : i32
    %c0_i32_1 = arith.constant 0 : i32
    return %arg0, %c0_i32, %c0_i32_0 : i32, i32, i32
  }
  func.func @transform_2(%arg0: i32, %arg1: i32) -> (i32, i32) {
    %c0_i32 = arith.constant 0 : i32
    %c0_i32_0 = arith.constant 0 : i32
    %c0_i32_1 = arith.constant 0 : i32
    return %c0_i32, %c0_i32_0 : i32, i32
  }
  func.func @transform_3(%arg0: i32, %arg1: i32) -> (i32, i32) {
    %c0_i32 = arith.constant 0 : i32
    %c0_i32_0 = arith.constant 0 : i32
    %c0_i32_1 = arith.constant 0 : i32
    return %c0_i32, %c0_i32_0 : i32, i32
  }
  func.func @transform_4(%arg0: i32, %arg1: i32) -> (i32, i32) {
    %c0_i32 = arith.constant 0 : i32
    %c0_i32_0 = arith.constant 0 : i32
    %c0_i32_1 = arith.constant 0 : i32
    return %c0_i32, %c0_i32_0 : i32, i32
  }
  func.func @transform_5(%arg0: i32, %arg1: i32) -> (i32, i32) {
    %c0_i32 = arith.constant 0 : i32
    %c0_i32_0 = arith.constant 0 : i32
    %c0_i32_1 = arith.constant 0 : i32
    return %c0_i32, %c0_i32_0 : i32, i32
  }
  func.func @transform_6(%arg0: i32, %arg1: i32) -> (i32, i32) {
    %c0_i32 = arith.constant 0 : i32
    %c0_i32_0 = arith.constant 0 : i32
    %c0_i32_1 = arith.constant 0 : i32
    return %c0_i32, %c0_i32_0 : i32, i32
  }
  func.func @transform_7(%arg0: i32, %arg1: i32) -> (i32, i32) {
    %c0_i32 = arith.constant 0 : i32
    %c0_i32_0 = arith.constant 0 : i32
    %c0_i32_1 = arith.constant 0 : i32
    return %c0_i32, %c0_i32_0 : i32, i32
  }
  func.func @transform_8(%arg0: i32, %arg1: i32) -> (i32, i32, i32) {
    %c0_i32 = arith.constant 0 : i32
    %c0_i32_0 = arith.constant 0 : i32
    return %arg0, %c0_i32, %arg1 : i32, i32, i32
  }
}

</mosaic_0001>

<llo_original>
// kernel: tpu_custom_call.1
$region0: #{tpu_custom_call.1}
  #allocation0 [shape = 'u32[]', space=smem, size = 0x4, offset = 0x4, fixed_abs, tag = 'smem constant byte address 0x4 - core index']
  #allocation1 [shape = 'u32[144,128]{1,0:T(1,128)}', space=vmem, size = 0x12000, scoped, tag = 'internal scratch']
  #allocation2 [shape = 'f32[1,1]{1,0:T(1,128)S(1)}', space=vmem, size = 0x200, scoped, tag = 'scoped memory for tpu_custom_call.1']
  %s0 = inlined_call_operand.vmem [shape: f32[2,4,256], index: 0, kind: input, shape index: {}]
  %s1 = inlined_call_operand.vmem [shape: f32[2,4,1], index: 1, kind: input, shape index: {}]
  %s2 = inlined_call_operand.vmem [shape: f32[65,4], index: 2, kind: input, shape index: {}]
  %s3 = inlined_call_operand.vmem [shape: f32[65,1], index: 3, kind: input, shape index: {}]
  %s4 = inlined_call_operand.vmem [shape: f32[33,32], index: 4, kind: input, shape index: {}]
  %s5 = inlined_call_operand.vmem [shape: f32[33,1], index: 5, kind: input, shape index: {}]
  %s6 = inlined_call_operand.vmem [shape: f32[1,32], index: 6, kind: input, shape index: {}]
  %s7 = inlined_call_operand.<no memory space> [shape: f32[1,1], index: 7, kind: input, shape index: {}]
  %s8 = inlined_call_operand.hbm [shape: f32[2,4,256], index: 8, kind: output, shape index: {}]
  %s9 = sld [smem:[#allocation0]]
  $region65: #{tpu_custom_call.1} parent=0
    _
  %s11 = ssub.s32 1, %s9
  %s12 = scalar_select 0, %s11, %s9
  %v13 = vstv %s7
  %14 = vst [vmem:[#allocation2] sm:$0x1] %v13
  $region1: #{tpu_custom_call.1} parent=0
    #allocation3 [shape = 'u8[8192]{0}', space=vmem, size = 0x2000, scoped, tag = 'output window, operand 0']
    #allocation4 [shape = 's32[2]{0}', space=sflag, size = 0x8, scoped, tag = 'scoped memory for tpu_custom_call.1']
    %15 = vsyncpa [#allocation4], 0
    %s16 = scalar_lea.sflag [#allocation4], 1
    %17 = vsyncpa %s16, 0
    loop: start=0, step=1, limit=4
    $region2: #{tpu_custom_call.1} parent=1 // loop_pre_header
      _
    $region3: #{tpu_custom_call.1} parent=1 // loop_header
      %s19 = sphi 0, %s23
      %p20 = scmp.ge.s32.totalorder %s19, 4
      %s26 = sphi 0, %s38
      %s27 = sphi 0, %s34
      %s28 = sphi 0, %s26
      %s29 = sphi 0, %s27
      %s30 = sphi 0, %s28
      %s31 = sphi 0, %s29
      %s43 = sphi 0, %s45
      %s46 = sphi 0, %s43
      %s47 = sphi 0, %s46
      %s63 = sphi 0, %s47
      %s69 = sphi 0, %s71
      %s72 = sphi 0, %s69
      %s73 = sphi 0, %s72
      %s89 = sphi 0, %s73
      %s93 = sphi 0, %s93
      %s95 = sphi 0, %s93
      %s96 = sphi 0, %s95
      %s110 = sphi 0, %s96
      %s114 = sphi 0, %s114
      %s116 = sphi 0, %s114
      %s117 = sphi 0, %s116
      %s131 = sphi 0, %s117
      %s135 = sphi 0, %s135
      %s137 = sphi 0, %s135
      %s138 = sphi 0, %s137
      %s152 = sphi 0, %s138
      %s156 = sphi 0, %s156
      %s158 = sphi 0, %s156
      %s159 = sphi 0, %s158
      %s173 = sphi 0, %s159
      %s177 = sphi 0, %s177
      %s179 = sphi 0, %s177
      %s180 = sphi 0, %s179
      %s194 = sphi 0, %s180
      %s198 = sphi 0, %s198
      %s200 = sphi 0, %s198
      %s201 = sphi 0, %s200
      %s215 = sphi 0, %s201
      %s223 = sphi 0, %s225
      %s226 = sphi 0, %s223
      %s227 = sphi 0, %s226
      %s243 = sphi 0, %s227
    $region4: #{tpu_custom_call.1} parent=1 // loop_header_branch
      %22 = sbr.rel (%p20) target = $region8
    $region5: #{tpu_custom_call.1} parent=1 // loop_body
      %s24 = ssub.s32 %s19, 1
      %s25 = ssub.s32 %s19, 2
      %s32 = sadd.s32 1, %s27
      %p33 = scmp.ge.s32.totalorder %s32, 1
      %s34 = scalar_select %p33, 0, %s32
      %s35 = sadd.s32 1, %s26
      %s36 = scalar_select %p33, %s35, %s26
      %p37 = scmp.ge.s32.totalorder %s36, 2
      %s38 = scalar_select %p37, 0, %s36
      %s39 = ssub.s32 %s26, %s38
      %s40 = ssub.s32 %s27, %s34
      %s41 = sor.u32 %s39, %s40
      %p42 = scmp.eq.s32.totalorder %s41, 0
      %s44 = sadd.s32 %s43, 1
      %s45 = scalar_select %p42, %s43, %s44
      %p48 = pneg %p42
      %p49 = scmp.eq.s32.totalorder %s19, 1
      %p50 = por %p48, %p49
      %p51 = scmp.ne.s32.totalorder %s43, %s46
      %p52 = scmp.eq.s32.totalorder %s19, 0
      %p53 = por %p51, %p52
      %p54 = scmp.ne.s32.totalorder %s43, %s46
      %p55 = scmp.eq.s32.totalorder %s24, 1
      %p56 = por %p54, %p55
      %p57 = scmp.ne.s32.totalorder %s46, %s47
      %p58 = scmp.eq.s32.totalorder %s24, 0
      %p59 = por %p57, %p58
      %p60 = scmp.ne.s32.totalorder %s46, %s47
      %p61 = scmp.eq.s32.totalorder %s25, 1
      %p62 = por %p60, %p61
      %p64 = scmp.ne.s32.totalorder %s47, %s63
      %p65 = scmp.eq.s32.totalorder %s25, 0
      %p66 = por %p64, %p65
      %s67 = ssub.s32 %s26, %s38
      %p68 = scmp.eq.s32.totalorder %s67, 0
      %s70 = sadd.s32 %s69, 1
      %s71 = scalar_select %p68, %s69, %s70
      %p74 = pneg %p68
      %p75 = scmp.eq.s32.totalorder %s19, 1
      %p76 = por %p74, %p75
      %p77 = scmp.ne.s32.totalorder %s69, %s72
      %p78 = scmp.eq.s32.totalorder %s19, 0
      %p79 = por %p77, %p78
      %p80 = scmp.ne.s32.totalorder %s69, %s72
      %p81 = scmp.eq.s32.totalorder %s24, 1
      %p82 = por %p80, %p81
      %p83 = scmp.ne.s32.totalorder %s72, %s73
      %p84 = scmp.eq.s32.totalorder %s24, 0
      %p85 = por %p83, %p84
      %p86 = scmp.ne.s32.totalorder %s72, %s73
      %p87 = scmp.eq.s32.totalorder %s25, 1
      %p88 = por %p86, %p87
      %p90 = scmp.ne.s32.totalorder %s73, %s89
      %p91 = scmp.eq.s32.totalorder %s25, 0
      %p92 = por %p90, %p91
      %s94 = sadd.s32 %s93, 1
      %p97 = scmp.eq.s32.totalorder %s19, 1
      %p98 = scmp.ne.s32.totalorder %s93, %s95
      %p99 = scmp.eq.s32.totalorder %s19, 0
      %p100 = por %p98, %p99
      %p101 = scmp.ne.s32.totalorder %s93, %s95
      %p102 = scmp.eq.s32.totalorder %s24, 1
      %p103 = por %p101, %p102
      %p104 = scmp.ne.s32.totalorder %s95, %s96
      %p105 = scmp.eq.s32.totalorder %s24, 0
      %p106 = por %p104, %p105
      %p107 = scmp.ne.s32.totalorder %s95, %s96
      %p108 = scmp.eq.s32.totalorder %s25, 1
      %p109 = por %p107, %p108
      %p111 = scmp.ne.s32.totalorder %s96, %s110
      %p112 = scmp.eq.s32.totalorder %s25, 0
      %p113 = por %p111, %p112
      %s115 = sadd.s32 %s114, 1
      %p118 = scmp.eq.s32.totalorder %s19, 1
      %p119 = scmp.ne.s32.totalorder %s114, %s116
      %p120 = scmp.eq.s32.totalorder %s19, 0
      %p121 = por %p119, %p120
      %p122 = scmp.ne.s32.totalorder %s114, %s116
      %p123 = scmp.eq.s32.totalorder %s24, 1
      %p124 = por %p122, %p123
      %p125 = scmp.ne.s32.totalorder %s116, %s117
      %p126 = scmp.eq.s32.totalorder %s24, 0
      %p127 = por %p125, %p126
      %p128 = scmp.ne.s32.totalorder %s116, %s117
      %p129 = scmp.eq.s32.totalorder %s25, 1
      %p130 = por %p128, %p129
      %p132 = scmp.ne.s32.totalorder %s117, %s131
      %p133 = scmp.eq.s32.totalorder %s25, 0
      %p134 = por %p132, %p133
      %s136 = sadd.s32 %s135, 1
      %p139 = scmp.eq.s32.totalorder %s19, 1
      %p140 = scmp.ne.s32.totalorder %s135, %s137
      %p141 = scmp.eq.s32.totalorder %s19, 0
      %p142 = por %p140, %p141
      %p143 = scmp.ne.s32.totalorder %s135, %s137
      %p144 = scmp.eq.s32.totalorder %s24, 1
      %p145 = por %p143, %p144
      %p146 = scmp.ne.s32.totalorder %s137, %s138
      %p147 = scmp.eq.s32.totalorder %s24, 0
      %p148 = por %p146, %p147
      %p149 = scmp.ne.s32.totalorder %s137, %s138
      %p150 = scmp.eq.s32.totalorder %s25, 1
      %p151 = por %p149, %p150
      %p153 = scmp.ne.s32.totalorder %s138, %s152
      %p154 = scmp.eq.s32.totalorder %s25, 0
      %p155 = por %p153, %p154
      %s157 = sadd.s32 %s156, 1
      %p160 = scmp.eq.s32.totalorder %s19, 1
      %p161 = scmp.ne.s32.totalorder %s156, %s158
      %p162 = scmp.eq.s32.totalorder %s19, 0
      %p163 = por %p161, %p162
      %p164 = scmp.ne.s32.totalorder %s156, %s158
      %p165 = scmp.eq.s32.totalorder %s24, 1
      %p166 = por %p164, %p165
      %p167 = scmp.ne.s32.totalorder %s158, %s159
      %p168 = scmp.eq.s32.totalorder %s24, 0
      %p169 = por %p167, %p168
      %p170 = scmp.ne.s32.totalorder %s158, %s159
      %p171 = scmp.eq.s32.totalorder %s25, 1
      %p172 = por %p170, %p171
      %p174 = scmp.ne.s32.totalorder %s159, %s173
      %p175 = scmp.eq.s32.totalorder %s25, 0
      %p176 = por %p174, %p175
      %s178 = sadd.s32 %s177, 1
      %p181 = scmp.eq.s32.totalorder %s19, 1
      %p182 = scmp.ne.s32.totalorder %s177, %s179
      %p183 = scmp.eq.s32.totalorder %s19, 0
      %p184 = por %p182, %p183
      %p185 = scmp.ne.s32.totalorder %s177, %s179
      %p186 = scmp.eq.s32.totalorder %s24, 1
      %p187 = por %p185, %p186
      %p188 = scmp.ne.s32.totalorder %s179, %s180
      %p189 = scmp.eq.s32.totalorder %s24, 0
      %p190 = por %p188, %p189
      %p191 = scmp.ne.s32.totalorder %s179, %s180
      %p192 = scmp.eq.s32.totalorder %s25, 1
      %p193 = por %p191, %p192
      %p195 = scmp.ne.s32.totalorder %s180, %s194
      %p196 = scmp.eq.s32.totalorder %s25, 0
      %p197 = por %p195, %p196
      %s199 = sadd.s32 %s198, 1
      %p202 = scmp.eq.s32.totalorder %s19, 1
      %p203 = scmp.ne.s32.totalorder %s198, %s200
      %p204 = scmp.eq.s32.totalorder %s19, 0
      %p205 = por %p203, %p204
      %p206 = scmp.ne.s32.totalorder %s198, %s200
      %p207 = scmp.eq.s32.totalorder %s24, 1
      %p208 = por %p206, %p207
      %p209 = scmp.ne.s32.totalorder %s200, %s201
      %p210 = scmp.eq.s32.totalorder %s24, 0
      %p211 = por %p209, %p210
      %p212 = scmp.ne.s32.totalorder %s200, %s201
      %p213 = scmp.eq.s32.totalorder %s25, 1
      %p214 = por %p212, %p213
      %p216 = scmp.ne.s32.totalorder %s201, %s215
      %p217 = scmp.eq.s32.totalorder %s25, 0
      %p218 = por %p216, %p217
      %s219 = ssub.s32 %s26, %s38
      %s220 = ssub.s32 %s27, %s34
      %s221 = sor.u32 %s219, %s220
      %p222 = scmp.eq.s32.totalorder %s221, 0
      %s224 = sadd.s32 %s223, 1
      %s225 = scalar_select %p222, %s223, %s224
      %p228 = pneg %p222
      %p229 = scmp.eq.s32.totalorder %s19, 1
      %p230 = por %p228, %p229
      %p231 = scmp.ne.s32.totalorder %s223, %s226
      %p232 = scmp.eq.s32.totalorder %s19, 0
      %p233 = por %p231, %p232
      %p234 = scmp.ne.s32.totalorder %s223, %s226
      %p235 = scmp.eq.s32.totalorder %s24, 1
      %p236 = por %p234, %p235
      %p237 = scmp.ne.s32.totalorder %s226, %s227
      %p238 = scmp.eq.s32.totalorder %s24, 0
      %p239 = por %p237, %p238
      %p240 = scmp.ne.s32.totalorder %s226, %s227
      %p241 = scmp.eq.s32.totalorder %s25, 1
      %p242 = por %p240, %p241
      %p244 = scmp.ne.s32.totalorder %s227, %s243
      %p245 = scmp.eq.s32.totalorder %s25, 0
      %p246 = por %p244, %p245
      %p247 = scmp.le.s32.totalorder 1, %s19
      %p248 = scmp.lt.s32.totalorder %s19, 3
      %p249 = pnand %p247, %p248
      %p250 = pneg %p249
      // Predicated region
      $region9: #{tpu_custom_call.1} parent=5 // pred_check
        _
      $region10: #{tpu_custom_call.1} parent=5 // pred_check_branch
        %252 = sbr.rel (%p249) target = $region12
      $region11: #{tpu_custom_call.1} parent=5 // pred_region
        %s253 = ssub.s32 %s19, 1
        // Predicated region
        $region13: #{tpu_custom_call.1} parent=11 // pred_check
          %p254 = pneg %p106
        $region14: #{tpu_custom_call.1} parent=11 // pred_check_branch
          %256 = sbr.rel (%p254) target = $region16
        $region15: #{tpu_custom_call.1} parent=11 // pred_region
          _
        $region16: #{tpu_custom_call.1} parent=11 // pred_fallthru
          _
        // Predicated region
        $region17: #{tpu_custom_call.1} parent=11 // pred_check
          %p257 = pneg %p127
        $region18: #{tpu_custom_call.1} parent=11 // pred_check_branch
          %259 = sbr.rel (%p257) target = $region20
        $region19: #{tpu_custom_call.1} parent=11 // pred_region
          _
        $region20: #{tpu_custom_call.1} parent=11 // pred_fallthru
          _
        // Predicated region
        $region21: #{tpu_custom_call.1} parent=11 // pred_check
          %p260 = pneg %p148
        $region22: #{tpu_custom_call.1} parent=11 // pred_check_branch
          %262 = sbr.rel (%p260) target = $region24
        $region23: #{tpu_custom_call.1} parent=11 // pred_region
          _
        $region24: #{tpu_custom_call.1} parent=11 // pred_fallthru
          _
        // Predicated region
        $region25: #{tpu_custom_call.1} parent=11 // pred_check
          %p263 = pneg %p169
        $region26: #{tpu_custom_call.1} parent=11 // pred_check_branch
          %265 = sbr.rel (%p263) target = $region28
        $region27: #{tpu_custom_call.1} parent=11 // pred_region
          _
        $region28: #{tpu_custom_call.1} parent=11 // pred_fallthru
          _
        // Predicated region
        $region29: #{tpu_custom_call.1} parent=11 // pred_check
          %p266 = pneg %p190
        $region30: #{tpu_custom_call.1} parent=11 // pred_check_branch
          %268 = sbr.rel (%p266) target = $region32
        $region31: #{tpu_custom_call.1} parent=11 // pred_region
          _
        $region32: #{tpu_custom_call.1} parent=11 // pred_fallthru
          _
        // Predicated region
        $region33: #{tpu_custom_call.1} parent=11 // pred_check
          %p269 = pneg %p211
        $region34: #{tpu_custom_call.1} parent=11 // pred_check_branch
          %271 = sbr.rel (%p269) target = $region36
        $region35: #{tpu_custom_call.1} parent=11 // pred_region
          _
        $region36: #{tpu_custom_call.1} parent=11 // pred_fallthru
          _
      $region12: #{tpu_custom_call.1} parent=5 // pred_fallthru
        _
      %p272 = scmp.lt.s32.totalorder %s19, 2
      // Predicated region
      $region37: #{tpu_custom_call.1} parent=5 // pred_check
        %p273 = pneg %p272
      $region38: #{tpu_custom_call.1} parent=5 // pred_check_branch
        %275 = sbr.rel (%p273) target = $region40
      $region39: #{tpu_custom_call.1} parent=5 // pred_region
        // Predicated region
        $region41: #{tpu_custom_call.1} parent=39 // pred_check
          %p276 = pneg %p53
        $region42: #{tpu_custom_call.1} parent=39 // pred_check_branch
          %278 = sbr.rel (%p276) target = $region44
        $region43: #{tpu_custom_call.1} parent=39 // pred_region
          %s279 = smul.u32 2, %s27
          %p280 = scmp.lt.s32.totalorder %s26, 1
          %s281 = scalar_select %p280, %s26, 1
          %p282 = scmp.lt.s32.totalorder %s279, 1
          %s283 = scalar_select %p282, %s279, 1
          %s284 = smul.addr %s281, 2
          %s285 = sadd.s32 %s283, %s284
          %s286 = smul.addr %s285, 4
          %s287 = scalar_lea.vmem %s0, %s286
          %s288 = smul.u32 2, %s27
        $region44: #{tpu_custom_call.1} parent=39 // pred_fallthru
          _
        // Predicated region
        $region45: #{tpu_custom_call.1} parent=39 // pred_check
          %p289 = pneg %p79
        $region46: #{tpu_custom_call.1} parent=39 // pred_check_branch
          %291 = sbr.rel (%p289) target = $region48
        $region47: #{tpu_custom_call.1} parent=39 // pred_region
          %p292 = scmp.lt.s32.totalorder %s26, 1
          %s293 = scalar_select %p292, %s26, 1
          %s294 = smul.addr %s293, 4
          %s295 = scalar_lea.vmem %s1, %s294
        $region48: #{tpu_custom_call.1} parent=39 // pred_fallthru
          _
      $region40: #{tpu_custom_call.1} parent=5 // pred_fallthru
        _
      %p296 = scmp.le.s32.totalorder 1, %s19
      %p297 = scmp.lt.s32.totalorder %s19, 3
      %p298 = pnand %p296, %p297
      %p299 = pneg %p298
      // Predicated region
      $region49: #{tpu_custom_call.1} parent=5 // pred_check
        _
      $region50: #{tpu_custom_call.1} parent=5 // pred_check_branch
        %301 = sbr.rel (%p298) target = $region52
      $region51: #{tpu_custom_call.1} parent=5 // pred_region
        %s302 = ssub.s32 %s19, 1
        %s303 = smul.u32 2, %s29
        %p304 = scmp.lt.s32.totalorder %s28, 1
        %s305 = scalar_select %p304, %s28, 1
        %p306 = scmp.lt.s32.totalorder %s303, 1
        %s307 = scalar_select %p306, %s303, 1
        %s308 = smul.addr %s305, 2
        %s309 = sadd.s32 %s307, %s308
        %s310 = smul.addr %s309, 4
        %s311 = scalar_lea.vmem %s0, %s310
        %p312 = pneg %p59
        %p313 = pneg %p56
        %p314 = scmp.lt.s32.totalorder %s28, 1
        %s315 = scalar_select %p314, %s28, 1
        %s316 = smul.addr %s315, 4
        %s317 = scalar_lea.vmem %s1, %s316
        %p318 = pneg %p85
        %p319 = pneg %p82
        %p320 = pneg %p106
        %p321 = pneg %p103
        %p322 = pneg %p127
        %p323 = pneg %p124
        %p324 = pneg %p148
        %p325 = pneg %p145
        %p326 = pneg %p169
        %p327 = pneg %p166
        %p328 = pneg %p190
        %p329 = pneg %p187
        %p330 = pneg %p211
        %p331 = pneg %p208
        %p332 = pneg %p239
        %p333 = pneg %p236
        %s334 = sand.u32 %s226, 1
        %s335 = scalar_lea.sflag [#allocation4], %s334
        %s336 = sand.u32 %s226, 1
        %s337 = smul.addr %s336, 8
        %s338 = scalar_lea.vmem [#allocation3], %s337
        %s339 = smul.u32 2, %s29
        %p340 = scmp.lt.s32.totalorder %s28, 1
        %s341 = scalar_select %p340, %s28, 1
        %p342 = scmp.lt.s32.totalorder %s339, 1
        %s343 = scalar_select %p342, %s339, 1
        %s344 = smul.addr %s341, 2
        %s345 = sadd.s32 %s343, %s344
        %s346 = smul.addr %s345, 4
        %s347 = scalar_lea.vmem %s0, %s346
        %s348 = smul.u32 2, %s29
        %p349 = scmp.lt.s32.totalorder %s28, 1
        %s350 = scalar_select %p349, %s28, 1
        %s351 = smul.addr %s350, 4
        %s352 = scalar_lea.vmem %s1, %s351
        %s353 = smul.u32 2, %s29
        %v354 = vld [vmem:[%s347] sm:$0xff]
        %v355 = vld [vmem:[%s2] sm:$0xff]
        %v356 = vld [vmem:[%s2 + $0x8] sm:$0xff]
        %v357 = vld [vmem:[%s2 + $0x10] sm:$0xff]
        %v358 = vld [vmem:[%s2 + $0x18] sm:$0xff]
        %v359 = vld [vmem:[%s2 + $0x20] sm:$0xff]
        %v360 = vld [vmem:[%s2 + $0x28] sm:$0xff]
        %v361 = vld [vmem:[%s2 + $0x30] sm:$0xff]
        %v362 = vld [vmem:[%s2 + $0x38] sm:$0xff]
        %v363 = vld [vmem:[%s2 + $0x40] sm:$0x1]
        %v364 = vld [vmem:[%s3] sm:$0xff]
        %v365 = vld [vmem:[%s3 + $0x8] sm:$0xff]
        %v366 = vld [vmem:[%s3 + $0x10] sm:$0xff]
        %v367 = vld [vmem:[%s3 + $0x18] sm:$0xff]
        %v368 = vld [vmem:[%s3 + $0x20] sm:$0xff]
        %v369 = vld [vmem:[%s3 + $0x28] sm:$0xff]
        %v370 = vld [vmem:[%s3 + $0x30] sm:$0xff]
        %v371 = vld [vmem:[%s3 + $0x38] sm:$0xff]
        %v372 = vld [vmem:[%s3 + $0x40] sm:$0x1]
        %374 = vset.pattern.permute.xlu0 0
        %375 = vperm.xlu0 %374, %v364
        %v376 = vpop.permute.xlu0 %375
        %379 = vset.pattern.permute.xlu0 0
        %380 = vperm.xlu0 %379, %v365
        %v381 = vpop.permute.xlu0 %380
        %384 = vset.pattern.permute.xlu0 0
        %385 = vperm.xlu0 %384, %v366
        %v386 = vpop.permute.xlu0 %385
        %389 = vset.pattern.permute.xlu0 0
        %390 = vperm.xlu0 %389, %v367
        %v391 = vpop.permute.xlu0 %390
        %394 = vset.pattern.permute.xlu0 0
        %395 = vperm.xlu0 %394, %v368
        %v396 = vpop.permute.xlu0 %395
        %399 = vset.pattern.permute.xlu0 0
        %400 = vperm.xlu0 %399, %v369
        %v401 = vpop.permute.xlu0 %400
        %404 = vset.pattern.permute.xlu0 0
        %405 = vperm.xlu0 %404, %v370
        %v406 = vpop.permute.xlu0 %405
        %409 = vset.pattern.permute.xlu0 0
        %410 = vperm.xlu0 %409, %v371
        %v411 = vpop.permute.xlu0 %410
        %414 = vset.pattern.permute.xlu0 0
        %415 = vperm.xlu0 %414, %v372
        %v416 = vpop.permute.xlu0 %415
        %v419 = vcombine.high %v354, %v354
        %vm420 = vcmask 31744
        %v422 = vsel %vm420, %v355, 0
        %v425 = vsel %vm420, %v356, 0
        %v428 = vsel %vm420, %v357, 0
        %v431 = vsel %vm420, %v358, 0
        %v434 = vsel %vm420, %v359, 0
        %v437 = vsel %vm420, %v360, 0
        %v440 = vsel %vm420, %v361, 0
        %v443 = vsel %vm420, %v362, 0
        %v446 = vsel %vm420, %v363, 0
        %vm448 = vcmask 1043456
        %v449 = vsel %vm448, %v354, 0
        %v451 = vsel %vm448, %v419, 0
        %453 = vmatprep.subr.mxu0 0.0
        %454 = vmatpush1.msra.mxu0 0.0
        %455 = vmatprep.subr.mxu0 0.0
        %456 = vmatpush1.msra.mxu0 0.0
        %457 = vmatprep.subr.mxu0 0.0
        %458 = vmatpush1.msra.mxu0 0.0
        %459 = vmatprep.subr.mxu0 0.0
        %460 = vmatpush1.msra.mxu0 0.0
        %461 = vmatprep.subr.mxu0 0.0
        %462 = vmatpush1.msra.mxu0 0.0
        %463 = vmatprep.subr.mxu0 0.0
        %464 = vmatpush1.msra.mxu0 0.0
        %465 = vmatprep.subr.mxu0 0.0
        %466 = vmatpush1.msra.mxu0 0.0
        %467 = vmatprep.subr.mxu0 0.0
        %468 = vmatpush1.msra.mxu0 0.0
        %469 = vmatprep.subr.mxu0 0.0
        %470 = vmatpush1.msra.mxu0 0.0
        %471 = vmatprep.subr.mxu0 0.0
        %472 = vmatpush1.msra.mxu0 0.0
        %473 = vmatprep.subr.mxu0 0.0
        %474 = vmatpush1.msra.mxu0 0.0
        %475 = vmatprep.subr.mxu0 0.0
        %476 = vmatpush1.msra.mxu0 0.0
        %477 = vmatprep.subr.mxu0 0.0
        %478 = vmatpush1.msra.mxu0 0.0
        %479 = vmatprep.subr.mxu0 0.0
        %480 = vmatpush1.msra.mxu0 0.0
        %481 = vmatprep.subr.mxu0 0.0
        %482 = vmatpush1.msra.mxu0 0.0
        %483 = vmatprep.subr.mxu0 %v451
        %484 = vmatpush1.msra.mxu0 %v449
        %485 = vmatprep.subr.mxu0 0.0
        %486 = vmatpush2.msra.mxu0 0.0
        %487 = vmatprep.subr.mxu0 0.0
        %488 = vmatpush2.msra.mxu0 0.0
        %489 = vmatprep.subr.mxu0 0.0
        %490 = vmatpush2.msra.mxu0 0.0
        %491 = vmatprep.subr.mxu0 0.0
        %492 = vmatpush2.msra.mxu0 0.0
        %493 = vmatprep.subr.mxu0 0.0
        %494 = vmatpush2.msra.mxu0 0.0
        %495 = vmatprep.subr.mxu0 0.0
        %496 = vmatpush2.msra.mxu0 0.0
        %497 = vmatprep.subr.mxu0 0.0
        %498 = vmatpush2.msra.mxu0 0.0
        %499 = vmatprep.subr.mxu0 0.0
        %500 = vmatpush2.msra.mxu0 0.0
        %501 = vmatprep.subr.mxu0 0.0
        %502 = vmatpush2.msra.mxu0 0.0
        %503 = vmatprep.subr.mxu0 0.0
        %504 = vmatpush2.msra.mxu0 0.0
        %505 = vmatprep.subr.mxu0 0.0
        %506 = vmatpush2.msra.mxu0 0.0
        %507 = vmatprep.subr.mxu0 0.0
        %508 = vmatpush2.msra.mxu0 0.0
        %509 = vmatprep.subr.mxu0 0.0
        %510 = vmatpush2.msra.mxu0 0.0
        %511 = vmatprep.subr.mxu0 0.0
        %512 = vmatpush2.msra.mxu0 0.0
        %513 = vmatprep.subr.mxu0 0.0
        %514 = vmatpush2.msra.mxu0 0.0
        %515 = vmatprep.subr.mxu0 0.0
        %516 = vmatpush2.msra.mxu0 0.0
        %517 = vmatprep.mubr.f32.mxu0 0.0
        %518 = vmatmul.mubr.f32.gmra.mxu0 %v422
        %v519 = vpop.f32.mrf.mxu0
        %v520 = vadd.f32 %v376, %v519
        %v521 = vpop.f32.mrf.mxu0
        %v522 = vadd.f32 %v376, %v521
        %523 = vmatprep.mubr.f32.mxu0 0.0
        %524 = vmatmul.mubr.f32.gmra.mxu0 %v425
        %v525 = vpop.f32.mrf.mxu0
        %v526 = vadd.f32 %v381, %v525
        %v527 = vpop.f32.mrf.mxu0
        %v528 = vadd.f32 %v381, %v527
        %529 = vmatprep.mubr.f32.mxu0 0.0
        %530 = vmatmul.mubr.f32.gmra.mxu0 %v428
        %v531 = vpop.f32.mrf.mxu0
        %v532 = vadd.f32 %v386, %v531
        %v533 = vpop.f32.mrf.mxu0
        %v534 = vadd.f32 %v386, %v533
        %535 = vmatprep.mubr.f32.mxu0 0.0
        %536 = vmatmul.mubr.f32.gmra.mxu0 %v431
        %v537 = vpop.f32.mrf.mxu0
        %v538 = vadd.f32 %v391, %v537
        %v539 = vpop.f32.mrf.mxu0
        %v540 = vadd.f32 %v391, %v539
        %541 = vmatprep.mubr.f32.mxu0 0.0
        %542 = vmatmul.mubr.f32.gmra.mxu0 %v434
        %v543 = vpop.f32.mrf.mxu0
        %v544 = vadd.f32 %v396, %v543
        %v545 = vpop.f32.mrf.mxu0
        %v546 = vadd.f32 %v396, %v545
        %547 = vmatprep.mubr.f32.mxu0 0.0
        %548 = vmatmul.mubr.f32.gmra.mxu0 %v437
        %v549 = vpop.f32.mrf.mxu0
        %v550 = vadd.f32 %v401, %v549
        %v551 = vpop.f32.mrf.mxu0
        %v552 = vadd.f32 %v401, %v551
        %553 = vmatprep.mubr.f32.mxu0 0.0
        %554 = vmatmul.mubr.f32.gmra.mxu0 %v440
        %v555 = vpop.f32.mrf.mxu0
        %v556 = vadd.f32 %v406, %v555
        %v557 = vpop.f32.mrf.mxu0
        %v558 = vadd.f32 %v406, %v557
        %559 = vmatprep.mubr.f32.mxu0 0.0
        %560 = vmatmul.mubr.f32.gmra.mxu0 %v443
        %v561 = vpop.f32.mrf.mxu0
        %v562 = vadd.f32 %v411, %v561
        %v563 = vpop.f32.mrf.mxu0
        %v564 = vadd.f32 %v411, %v563
        %565 = vmatprep.mubr.f32.mxu0 0.0
        %566 = vmatmul.mubr.f32.gmra.mxu0 %v446
        %v567 = vpop.f32.mrf.mxu0
        %v568 = vadd.f32 %v416, %v567
        %v569 = vpop.f32.mrf.mxu0
        %v570 = vadd.f32 %v416, %v569
        %571 = vdwg.mxu0
        %v572 = vmax.f32 %v520, 0.0
        %v573 = vmax.f32 %v522, 0.0
        %v574 = vmax.f32 %v526, 0.0
        %v575 = vmax.f32 %v528, 0.0
        %v576 = vmax.f32 %v532, 0.0
        %v577 = vmax.f32 %v534, 0.0
        %v578 = vmax.f32 %v538, 0.0
        %v579 = vmax.f32 %v540, 0.0
        %v580 = vld [vmem:[%s4] sm:$0xff]
        %v581 = vld [vmem:[%s4 + $0x8] sm:$0xff]
        %v582 = vld [vmem:[%s4 + $0x10] sm:$0xff]
        %v583 = vld [vmem:[%s4 + $0x18] sm:$0xff]
        %v584 = vld [vmem:[%s4 + $0x20] sm:$0x1]
        %v585 = vld [vmem:[%s5] sm:$0xff]
        %v586 = vld [vmem:[%s5 + $0x8] sm:$0xff]
        %v587 = vld [vmem:[%s5 + $0x10] sm:$0xff]
        %v588 = vld [vmem:[%s5 + $0x18] sm:$0xff]
        %v589 = vld [vmem:[%s5 + $0x20] sm:$0x1]
        %591 = vset.pattern.permute.xlu0 0
        %592 = vperm.xlu0 %591, %v585
        %v593 = vpop.permute.xlu0 %592
        %596 = vset.pattern.permute.xlu0 0
        %597 = vperm.xlu0 %596, %v586
        %v598 = vpop.permute.xlu0 %597
        %601 = vset.pattern.permute.xlu0 0
        %602 = vperm.xlu0 %601, %v587
        %v603 = vpop.permute.xlu0 %602
        %606 = vset.pattern.permute.xlu0 0
        %607 = vperm.xlu0 %606, %v588
        %v608 = vpop.permute.xlu0 %607
        %611 = vset.pattern.permute.xlu0 0
        %612 = vperm.xlu0 %611, %v589
        %v613 = vpop.permute.xlu0 %612
        %vm615 = vcmask 261120
        %v617 = vsel %vm615, %v580, 0
        %v620 = vsel %vm615, %v581, 0
        %v623 = vsel %vm615, %v582, 0
        %v626 = vsel %vm615, %v583, 0
        %v629 = vsel %vm615, %v584, 0
        %631 = vmatprep.subr.mxu0 0.0
        %632 = vmatpush1.msra.mxu0 0.0
        %633 = vmatprep.subr.mxu0 0.0
        %634 = vmatpush1.msra.mxu0 0.0
        %635 = vmatprep.subr.mxu0 0.0
        %636 = vmatpush1.msra.mxu0 0.0
        %637 = vmatprep.subr.mxu0 0.0
        %638 = vmatpush1.msra.mxu0 0.0
        %639 = vmatprep.subr.mxu0 0.0
        %640 = vmatpush1.msra.mxu0 0.0
        %641 = vmatprep.subr.mxu0 0.0
        %642 = vmatpush1.msra.mxu0 0.0
        %643 = vmatprep.subr.mxu0 0.0
        %644 = vmatpush1.msra.mxu0 0.0
        %645 = vmatprep.subr.mxu0 0.0
        %646 = vmatpush1.msra.mxu0 0.0
        %647 = vmatprep.subr.mxu0 0.0
        %648 = vmatpush1.msra.mxu0 0.0
        %649 = vmatprep.subr.mxu0 0.0
        %650 = vmatpush1.msra.mxu0 0.0
        %651 = vmatprep.subr.mxu0 0.0
        %652 = vmatpush1.msra.mxu0 0.0
        %653 = vmatprep.subr.mxu0 0.0
        %654 = vmatpush1.msra.mxu0 0.0
        %655 = vmatprep.subr.mxu0 %v579
        %656 = vmatpush1.msra.mxu0 %v578
        %657 = vmatprep.subr.mxu0 %v577
        %658 = vmatpush1.msra.mxu0 %v576
        %659 = vmatprep.subr.mxu0 %v575
        %660 = vmatpush1.msra.mxu0 %v574
        %661 = vmatprep.subr.mxu0 %v573
        %662 = vmatpush1.msra.mxu0 %v572
        %663 = vmatprep.subr.mxu0 0.0
        %664 = vmatpush2.msra.mxu0 0.0
        %665 = vmatprep.subr.mxu0 0.0
        %666 = vmatpush2.msra.mxu0 0.0
        %667 = vmatprep.subr.mxu0 0.0
        %668 = vmatpush2.msra.mxu0 0.0
        %669 = vmatprep.subr.mxu0 0.0
        %670 = vmatpush2.msra.mxu0 0.0
        %671 = vmatprep.subr.mxu0 0.0
        %672 = vmatpush2.msra.mxu0 0.0
        %673 = vmatprep.subr.mxu0 0.0
        %674 = vmatpush2.msra.mxu0 0.0
        %675 = vmatprep.subr.mxu0 0.0
        %676 = vmatpush2.msra.mxu0 0.0
        %677 = vmatprep.subr.mxu0 0.0
        %678 = vmatpush2.msra.mxu0 0.0
        %679 = vmatprep.subr.mxu0 0.0
        %680 = vmatpush2.msra.mxu0 0.0
        %681 = vmatprep.subr.mxu0 0.0
        %682 = vmatpush2.msra.mxu0 0.0
        %683 = vmatprep.subr.mxu0 0.0
        %684 = vmatpush2.msra.mxu0 0.0
        %685 = vmatprep.subr.mxu0 0.0
        %686 = vmatpush2.msra.mxu0 0.0
        %687 = vmatprep.subr.mxu0 0.0
        %688 = vmatpush2.msra.mxu0 0.0
        %689 = vmatprep.subr.mxu0 0.0
        %690 = vmatpush2.msra.mxu0 0.0
        %691 = vmatprep.subr.mxu0 0.0
        %692 = vmatpush2.msra.mxu0 0.0
        %693 = vmatprep.subr.mxu0 0.0
        %694 = vmatpush2.msra.mxu0 0.0
        %695 = vmatprep.mubr.f32.mxu0 0.0
        %696 = vmatmul.mubr.f32.gmra.mxu0 %v617
        %v697 = vpop.f32.mrf.mxu0
        %v698 = vadd.f32 %v593, %v697
        %v699 = vpop.f32.mrf.mxu0
        %v700 = vadd.f32 %v593, %v699
        %701 = vmatprep.mubr.f32.mxu0 0.0
        %702 = vmatmul.mubr.f32.gmra.mxu0 %v620
        %v703 = vpop.f32.mrf.mxu0
        %v704 = vadd.f32 %v598, %v703
        %v705 = vpop.f32.mrf.mxu0
        %v706 = vadd.f32 %v598, %v705
        %707 = vmatprep.mubr.f32.mxu0 0.0
        %708 = vmatmul.mubr.f32.gmra.mxu0 %v623
        %v709 = vpop.f32.mrf.mxu0
        %v710 = vadd.f32 %v603, %v709
        %v711 = vpop.f32.mrf.mxu0
        %v712 = vadd.f32 %v603, %v711
        %713 = vmatprep.mubr.f32.mxu0 0.0
        %714 = vmatmul.mubr.f32.gmra.mxu0 %v626
        %v715 = vpop.f32.mrf.mxu0
        %v716 = vadd.f32 %v608, %v715
        %v717 = vpop.f32.mrf.mxu0
        %v718 = vadd.f32 %v608, %v717
        %719 = vmatprep.mubr.f32.mxu0 0.0
        %720 = vmatmul.mubr.f32.gmra.mxu0 %v629
        %v721 = vpop.f32.mrf.mxu0
        %v722 = vadd.f32 %v613, %v721
        %v723 = vpop.f32.mrf.mxu0
        %v724 = vadd.f32 %v613, %v723
        %725 = vdwg.mxu0
        %v726 = vmax.f32 %v544, 0.0
        %v727 = vmax.f32 %v546, 0.0
        %v728 = vmax.f32 %v550, 0.0
        %v729 = vmax.f32 %v552, 0.0
        %v730 = vmax.f32 %v556, 0.0
        %v731 = vmax.f32 %v558, 0.0
        %v732 = vmax.f32 %v562, 0.0
        %v733 = vmax.f32 %v564, 0.0
        %v734 = vmax.f32 %v698, 0.0
        %v735 = vmax.f32 %v700, 0.0
        %v736 = vmax.f32 %v704, 0.0
        %v737 = vmax.f32 %v706, 0.0
        %v738 = vmax.f32 %v710, 0.0
        %v739 = vmax.f32 %v712, 0.0
        %v740 = vmax.f32 %v716, 0.0
        %v741 = vmax.f32 %v718, 0.0
        %v742 = vadd.f32 %v726, %v734
        %v743 = vadd.f32 %v727, %v735
        %v744 = vadd.f32 %v728, %v736
        %v745 = vadd.f32 %v729, %v737
        %v746 = vadd.f32 %v730, %v738
        %v747 = vadd.f32 %v731, %v739
        %v748 = vadd.f32 %v732, %v740
        %v749 = vadd.f32 %v733, %v741
        %v750 = vxor.u32 %v568, 2147483648
        %v751 = vxor.u32 %v570, 2147483648
        %v752 = vmul.f32 %v750, 1.442695
        %v753 = vpow.pop %v752
        %v754 = vmul.f32 %v751, 1.442695
        %v755 = vpow.pop %v754
        %v756 = vadd.f32 %v753, 1.0
        %v757 = vadd.f32 %v755, 1.0
        %v758 = vrcp.pop %v756
        %v759 = vmul.f32 1.0, %v758
        %v760 = vrcp.pop %v757
        %v761 = vmul.f32 1.0, %v760
        %v762 = vxor.u32 %v722, 2147483648
        %v763 = vxor.u32 %v724, 2147483648
        %v764 = vmul.f32 %v762, 1.442695
        %v765 = vpow.pop %v764
        %v766 = vmul.f32 %v763, 1.442695
        %v767 = vpow.pop %v766
        %v768 = vadd.f32 %v765, 1.0
        %v769 = vadd.f32 %v767, 1.0
        %v770 = vrcp.pop %v768
        %v771 = vmul.f32 1.0, %v770
        %v772 = vrcp.pop %v769
        %v773 = vmul.f32 1.0, %v772
        %v774 = vadd.f32 %v759, %v771
        %v775 = vadd.f32 %v761, %v773
        %v776 = vld [vmem:[%s6] sm:$0x1]
        %v777 = vld [vmem:[#allocation2] sm:$0x1]
        %779 = vset.pattern.permute.xlu0 0
        %780 = vperm.xlu0 %779, %v777
        %v781 = vpop.permute.xlu0 %780
        %v783 = vlaneseq
        %v784 = vshrl.u32 %v783, 7
        %v785 = vsub.s32 0, %v784
        %v786 = vrot.slane %v781, %v785
        %v788 = vsel %vm615, %v776, 0
        %790 = vmatprep.subr.mxu0 0.0
        %791 = vmatpush1.msra.mxu0 0.0
        %792 = vmatprep.subr.mxu0 0.0
        %793 = vmatpush1.msra.mxu0 0.0
        %794 = vmatprep.subr.mxu0 0.0
        %795 = vmatpush1.msra.mxu0 0.0
        %796 = vmatprep.subr.mxu0 0.0
        %797 = vmatpush1.msra.mxu0 0.0
        %798 = vmatprep.subr.mxu0 0.0
        %799 = vmatpush1.msra.mxu0 0.0
        %800 = vmatprep.subr.mxu0 0.0
        %801 = vmatpush1.msra.mxu0 0.0
        %802 = vmatprep.subr.mxu0 0.0
        %803 = vmatpush1.msra.mxu0 0.0
        %804 = vmatprep.subr.mxu0 0.0
        %805 = vmatpush1.msra.mxu0 0.0
        %806 = vmatprep.subr.mxu0 0.0
        %807 = vmatpush1.msra.mxu0 0.0
        %808 = vmatprep.subr.mxu0 0.0
        %809 = vmatpush1.msra.mxu0 0.0
        %810 = vmatprep.subr.mxu0 0.0
        %811 = vmatpush1.msra.mxu0 0.0
        %812 = vmatprep.subr.mxu0 0.0
        %813 = vmatpush1.msra.mxu0 0.0
        %814 = vmatprep.subr.mxu0 %v749
        %815 = vmatpush1.msra.mxu0 %v748
        %816 = vmatprep.subr.mxu0 %v747
        %817 = vmatpush1.msra.mxu0 %v746
        %818 = vmatprep.subr.mxu0 %v745
        %819 = vmatpush1.msra.mxu0 %v744
        %820 = vmatprep.subr.mxu0 %v743
        %821 = vmatpush1.msra.mxu0 %v742
        %822 = vmatprep.subr.mxu0 0.0
        %823 = vmatpush2.msra.mxu0 0.0
        %824 = vmatprep.subr.mxu0 0.0
        %825 = vmatpush2.msra.mxu0 0.0
        %826 = vmatprep.subr.mxu0 0.0
        %827 = vmatpush2.msra.mxu0 0.0
        %828 = vmatprep.subr.mxu0 0.0
        %829 = vmatpush2.msra.mxu0 0.0
        %830 = vmatprep.subr.mxu0 0.0
        %831 = vmatpush2.msra.mxu0 0.0
        %832 = vmatprep.subr.mxu0 0.0
        %833 = vmatpush2.msra.mxu0 0.0
        %834 = vmatprep.subr.mxu0 0.0
        %835 = vmatpush2.msra.mxu0 0.0
        %836 = vmatprep.subr.mxu0 0.0
        %837 = vmatpush2.msra.mxu0 0.0
        %838 = vmatprep.subr.mxu0 0.0
        %839 = vmatpush2.msra.mxu0 0.0
        %840 = vmatprep.subr.mxu0 0.0
        %841 = vmatpush2.msra.mxu0 0.0
        %842 = vmatprep.subr.mxu0 0.0
        %843 = vmatpush2.msra.mxu0 0.0
        %844 = vmatprep.subr.mxu0 0.0
        %845 = vmatpush2.msra.mxu0 0.0
        %846 = vmatprep.subr.mxu0 0.0
        %847 = vmatpush2.msra.mxu0 0.0
        %848 = vmatprep.subr.mxu0 0.0
        %849 = vmatpush2.msra.mxu0 0.0
        %850 = vmatprep.subr.mxu0 0.0
        %851 = vmatpush2.msra.mxu0 0.0
        %852 = vmatprep.subr.mxu0 0.0
        %853 = vmatpush2.msra.mxu0 0.0
        %854 = vmatprep.mubr.f32.mxu0 0.0
        %855 = vmatmul.mubr.f32.gmra.mxu0 %v788
        %v856 = vpop.f32.mrf.mxu0
        %v857 = vadd.f32 %v786, %v856
        %v858 = vpop.f32.mrf.mxu0
        %v859 = vadd.f32 %v786, %v858
        %860 = vdwg.mxu0
        %v861 = vxor.u32 %v857, 2147483648
        %v862 = vxor.u32 %v859, 2147483648
        %v863 = vmul.f32 %v861, 1.442695
        %v864 = vpow.pop %v863
        %v865 = vmul.f32 %v862, 1.442695
        %v866 = vpow.pop %v865
        %v867 = vadd.f32 %v864, 1.0
        %v868 = vadd.f32 %v866, 1.0
        %v869 = vrcp.pop %v867
        %v870 = vmul.f32 1.0, %v869
        %v871 = vrcp.pop %v868
        %v872 = vmul.f32 1.0, %v871
        %v873 = vadd.f32 %v774, %v870
        %v874 = vadd.f32 %v775, %v872
        %v875 = vmul.f32 %v873, 0.33333334
        %v876 = vmul.f32 %v874, 0.33333334
        %v877 = vlaneseq
        %v878 = vshrl.u32 %v877, 7
        %v879 = vsub.s32 0, %v878
        %v880 = vrot.slane %v875, %v879
        %v881 = vlaneseq
        %v882 = vshrl.u32 %v881, 7
        %v883 = vsub.s32 0, %v882
        %v884 = vrot.slane %v876, %v883
        %v887 = vcombine.low %v880, %v884
        %v889 = vmul.f32 %v354, %v887
        %v890 = vld [vmem:[%s352] sm:$0xf]
        %892 = vset.pattern.permute.xlu0 0
        %893 = vperm.xlu0 %892, %v890
        %v894 = vpop.permute.xlu0 %893
        %v896 = vunpack.c.l.s4 839922192
        %v897 = vunpack.c.0.s8 %v896
        %v898 = vlaneseq
        %v899 = vshrl.u32 %v898, 7
        %v900 = vsub.s32 %v897, %v899
        %v901 = vrot.slane %v894, %v900
        %v903 = vmul.f32 %v354, %v901
        %v904 = vmax.f32 %v889, %v903
        %905 = vst [vmem:[%s338] sm:$0xff] %v904
        %s906 = sand.u32 %s226, 1
        %s907 = scalar_lea.sflag [#allocation4], %s906
        %s908 = sand.u32 %s226, 1
        %s909 = smul.addr %s908, 8
        %s910 = scalar_lea.vmem [#allocation3], %s909
        // Predicated region
        $region53: #{tpu_custom_call.1} parent=51 // pred_check
          %p911 = pneg %p236
        $region54: #{tpu_custom_call.1} parent=51 // pred_check_branch
          %913 = sbr.rel (%p911) target = $region56
        $region55: #{tpu_custom_call.1} parent=51 // pred_region
          %s914 = smul.u32 2, %s29
          %s916 = ssub.s32 128, 128
          %917 = vsyncadd %s907, %s916
          %s918 = smul.addr %s28, 2
          %s919 = sadd.s32 %s914, %s918
          %s920 = smul.addr %s919, 64
          %s921 = scalar_lea.hbm %s8, %s920
          %s923 = sshll.u32 %s910, 4
          %s924 = int_to_ptr.vmem [resolvable:$true] %s923
          %926 = dma.vmem_to_hbm [thread:$0]  %s924, 128, %s921, %s907
        $region56: #{tpu_custom_call.1} parent=51 // pred_fallthru
          _
      $region52: #{tpu_custom_call.1} parent=5 // pred_fallthru
        _
      %p927 = scmp.le.s32.totalorder 2, %s19
      // Predicated region
      $region57: #{tpu_custom_call.1} parent=5 // pred_check
        %p928 = pneg %p927
      $region58: #{tpu_custom_call.1} parent=5 // pred_check_branch
        %930 = sbr.rel (%p928) target = $region60
      $region59: #{tpu_custom_call.1} parent=5 // pred_region
        %s931 = ssub.s32 %s19, 2
        // Predicated region
        $region61: #{tpu_custom_call.1} parent=59 // pred_check
          %p932 = pneg %p242
        $region62: #{tpu_custom_call.1} parent=59 // pred_check_branch
          %934 = sbr.rel (%p932) target = $region64
        $region63: #{tpu_custom_call.1} parent=59 // pred_region
          %s935 = sand.u32 %s227, 1
          %s936 = scalar_lea.sflag [#allocation4], %s935
          %s937 = sand.u32 %s227, 1
          %s938 = smul.addr %s937, 8
          %s939 = scalar_lea.vmem [#allocation3], %s938
          %940 = dma.done %s936, 128
        $region64: #{tpu_custom_call.1} parent=59 // pred_fallthru
          _
      $region60: #{tpu_custom_call.1} parent=5 // pred_fallthru
        _
    $region6: #{tpu_custom_call.1} parent=1 // loop_footer
      %s23 = sadd.s32 1, %s19
    $region7: #{tpu_custom_call.1} parent=1 // loop_footer_branch
      %18 = sbr.rel target = $region3
    $region8: #{tpu_custom_call.1} parent=1 // loop_exit
      _
    %941 = vsyncpa [#allocation4], 1
    %s942 = scalar_lea.sflag [#allocation4], 1
    %943 = vsyncpa %s942, 1

</llo_original>
